<compile_context>
chip_gen: v5e
topology: v5e:2x2
jax: 0.10.0
libtpu: 0.0.40
codegen_flags: <defaults>
</compile_context>

<pallas_src>
import numpy as np
import jax
import jax.numpy as jnp
from jax.experimental import pallas as pl
from jax.experimental.pallas import tpu as pltpu


# ----------------------------- Pallas kernels ---------------------------------
def _bau_kron_kernel(x_ref, kron_ref, out_ref):
    """One grid step == one (batch, output-channel tile). Flat, lane-dense layout.

    x_ref    : (1, co_tile*n, H*W)   input channels of this tile (caller dtype)
    kron_ref : (H*W, H2*W2)          (1/n) * kron(A_h, A_w)^T, f32
    out_ref  : (1, co_tile, H2*W2)
    """
    _, cb, hw = x_ref.shape
    _, cot, _ = out_ref.shape
    n = cb // cot

    x = x_ref[0].astype(jnp.float32)                       # (Cb, HW)
    # channel-group sum (1/n is folded into kron_ref): cheap reduce
    xm = jnp.sum(x.reshape(cot, n, hw), axis=1)            # (cot, HW)
    # single big MXU matmul; result is already the lane-dense flat output
    out = jnp.dot(xm, kron_ref[...], preferred_element_type=jnp.float32)
    out_ref[0] = out.astype(out_ref.dtype)                 # (cot, H2*W2)


def _bau_sep_kernel(x_ref, awt_ref, ah_ref, out_ref):
    """Separable fallback for large spatial maps (kron constant would be too big).

    x_ref   : (1, co_tile*n, H, W)
    awt_ref : (W, W2)    (1/n) * A_w^T, f32
    ah_ref  : (H2, H)    A_h, f32
    out_ref : (1, co_tile, H2*W2)
    """
    _, cb, h, w = x_ref.shape
    _, cot, _ = out_ref.shape
    n = cb // cot
    w2 = awt_ref.shape[1]
    h2 = ah_ref.shape[0]

    x = x_ref[0].astype(jnp.float32)                       # (Cb, H, W)
    xm = jnp.sum(x.reshape(cot, n, h, w), axis=1)          # (cot, H, W)

    # width upsample: one plain MXU matmul
    t = jnp.dot(xm.reshape(cot * h, w), awt_ref[...],
                preferred_element_type=jnp.float32)        # (cot*H, W2)
    # height upsample: ONE matmul over the channel-fused lane dim (no batched einsum)
    t = t.reshape(cot, h, w2).transpose(1, 0, 2).reshape(h, cot * w2)
    u = jnp.dot(ah_ref[...], t, preferred_element_type=jnp.float32)   # (H2, cot*W2)
    u = u.reshape(h2, cot, w2).transpose(1, 0, 2).reshape(cot, h2 * w2)
    out_ref[0] = u.astype(out_ref.dtype)


# ------------------------------- glue helpers --------------------------------
def _bilinear_matrix_np(n_in, n_out):
    """align_corners=True (nn.UpsamplingBilinear2d) 1-D interpolation matrix, built
    with numpy at trace time. Guards the n_in == 1 degenerate case."""
    if n_in == 1:
        return np.ones((n_out, 1), np.float32)
    src = np.arange(n_out, dtype=np.float64) * (n_in - 1) / (n_out - 1)
    i0 = np.clip(np.floor(src).astype(np.int64), 0, n_in - 1)
    i1 = np.clip(i0 + 1, 0, n_in - 1)
    f = src - i0
    a = np.zeros((n_out, n_in), np.float64)
    rows = np.arange(n_out)
    np.add.at(a, (rows, i0), 1.0 - f)
    np.add.at(a, (rows, i1), f)
    return a.astype(np.float32)


def _vmem_capacity_bytes():
    """Physical VMEM of the current chip; conservative default if unqueryable."""
    try:
        info = pltpu.get_tpu_info()
        cap = getattr(info, "vmem_capacity_bytes", None)
        if cap:
            return int(cap)
    except Exception:
        pass
    return 64 << 20   # v7x-sized default (smallest of v5e/v6e/v7x)


def _pick_co_tile(Co, N, in_bytes_per_co, out_bytes_per_co, fixed_bytes, budget):
    """Largest divisor of Co whose double-buffered (input+output) blocks + constants
    fit `budget`. Divisors are restricted to Co itself or multiples of 8 so the
    channel block dim satisfies the (8,128) layout rule; prefer keeping >= 2 grid
    steps so both v7x TensorCores get work."""
    divisors = [d for d in range(1, Co + 1) if Co % d == 0]
    allowed = [d for d in divisors if d == Co or d % 8 == 0] or [min(divisors)]
    allowed = sorted(allowed, reverse=True)
    fitting = [d for d in allowed
               if 2 * d * (in_bytes_per_co + out_bytes_per_co) + fixed_bytes <= budget]
    if not fitting:
        return allowed[-1]
    for d in fitting:
        if N * (Co // d) >= 2:
            return d
    return fitting[0]


def bilinear_additive_upsample2d(x_nchw, n=4, scale_factor=2):
    """x_nchw: (N, C, H, W) with C % n == 0. Returns (N, C//n, H*s, W*s) in NCHW,
    in the caller's dtype (f32 accumulation inside the kernel)."""
    N, C, H, W = x_nchw.shape
    if C % n != 0:
        raise ValueError(f"in_channels ({C}) must be divisible by n ({n})")
    Co = C // n
    H2, W2 = H * scale_factor, W * scale_factor
    HW, HW2 = H * W, H2 * W2

    cap = _vmem_capacity_bytes()
    budget = cap // 4                         # double-buffered working-set budget
    out_dtype = x_nchw.dtype
    in_itemsize = jnp.dtype(x_nchw.dtype).itemsize
    out_itemsize = jnp.dtype(out_dtype).itemsize

    kron_bytes = HW * HW2 * 4
    use_kron = kron_bytes <= min(4 << 20, budget // 4)
    fixed = 2 * kron_bytes if use_kron else 2 * (W * W2 + H2 * H) * 4

    in_per_co = n * HW * in_itemsize
    out_per_co = HW2 * out_itemsize
    co_tile = _pick_co_tile(Co, N, in_per_co, out_per_co, fixed, budget)

    needed = 2 * co_tile * (in_per_co + out_per_co) + fixed
    vmem_limit = int(min(cap // 2, max(needed + (4 << 20), 32 << 20)))

    a_h = _bilinear_matrix_np(H, H2)                     # (H2, H)
    a_w = _bilinear_matrix_np(W, W2)                     # (W2, W)

    out_flat_shape = jax.ShapeDtypeStruct((N, Co, HW2), out_dtype)
    cparams = pltpu.CompilerParams(
        dimension_semantics=("parallel", "parallel"),
        vmem_limit_bytes=vmem_limit)

    if use_kron:
        # (1/n) * kron(A_h, A_w)^T : out_flat_row = x_flat_row @ kron_t
        kron_t = jnp.asarray((np.kron(a_h, a_w).T / float(n)).astype(np.float32))
        x_flat = x_nchw.reshape(N, C, HW)                # free row-major reshape
        out = pl.pallas_call(
            _bau_kron_kernel,
            out_shape=out_flat_shape,
            grid_spec=pltpu.PrefetchScalarGridSpec(
                num_scalar_prefetch=0,
                grid=(N, Co // co_tile),
                in_specs=[
                    pl.BlockSpec((1, co_tile * n, HW), lambda b, j: (b, j, 0)),
                    pl.BlockSpec((HW, HW2), lambda b, j: (0, 0)),
                ],
                out_specs=pl.BlockSpec((1, co_tile, HW2), lambda b, j: (b, j, 0)),
            ),
            compiler_params=cparams,
        )(x_flat, kron_t)
    else:
        a_wt = jnp.asarray((a_w.T / float(n)).astype(np.float32))   # (W, W2), 1/n folded
        a_hj = jnp.asarray(a_h)                                     # (H2, H)
        out = pl.pallas_call(
            _bau_sep_kernel,
            out_shape=out_flat_shape,
            grid_spec=pltpu.PrefetchScalarGridSpec(
                num_scalar_prefetch=0,
                grid=(N, Co // co_tile),
                in_specs=[
                    pl.BlockSpec((1, co_tile * n, H, W), lambda b, j: (b, j, 0, 0)),
                    pl.BlockSpec((W, W2), lambda b, j: (0, 0)),
                    pl.BlockSpec((H2, H), lambda b, j: (0, 0)),
                ],
                out_specs=pl.BlockSpec((1, co_tile, HW2), lambda b, j: (b, j, 0)),
            ),
            compiler_params=cparams,
        )(x_nchw, a_wt, a_hj)

    return out.reshape(N, Co, H2, W2)                    # free reshape back to NCHW


# ---------------------------- pure-JAX reference ------------------------------
def _upsample_bilinear_ref(x, scale=2):
    """nn.UpsamplingBilinear2d (align_corners=True) reference."""
    N, C, H, W = x.shape
    Ho, Wo = H * scale, W * scale

    def coords(n_in, n_out):
        if n_in == 1:
            z = jnp.zeros((n_out,), jnp.int32)
            return z, z, jnp.zeros((n_out,), jnp.float32)
        src = jnp.arange(n_out, dtype=jnp.float32) * (n_in - 1) / (n_out - 1)
        i0 = jnp.clip(jnp.floor(src).astype(jnp.int32), 0, n_in - 1)
        i1 = jnp.clip(i0 + 1, 0, n_in - 1)
        return i0, i1, src - i0.astype(jnp.float32)

    r0, r1, rf = coords(H, Ho)
    c0, c1, cf = coords(W, Wo)
    xr = (x[:, :, r0, :] * (1 - rf)[None, None, :, None]
          + x[:, :, r1, :] * rf[None, None, :, None])
    return xr[:, :, :, c0] * (1 - cf) + xr[:, :, :, c1] * cf


def _bilinear_additive_ref(x, n=4, scale=2):
    up = _upsample_bilinear_ref(x, scale)
    N, C, Ho, Wo = up.shape
    return up.reshape(N, C // n, n, Ho, Wo).mean(2)


# ----------------------------------- main -------------------------------------
if __name__ == "__main__":
    key = jax.random.PRNGKey(0)

    N, C, H, W = 2, 8, 16, 16
    n = 4
    Co = C // n

    x = jax.random.normal(key, (N, C, H, W), jnp.float32)

    out = bilinear_additive_upsample2d(x, n=n, scale_factor=2)
    out = jax.block_until_ready(out)

    ref = _bilinear_additive_ref(x, n=n, scale=2)
    assert out.shape == (N, Co, 2 * H, 2 * W), out.shape
    max_err = float(jnp.max(jnp.abs(out - ref)))
    assert jnp.allclose(out, ref, rtol=1e-4, atol=1e-4), f"max_err={max_err}"

    print("KERNEL_OK")
</pallas_src>

<mosaic_0001>
module attributes {stable_mosaic.version = 11 : i64} {
  func.func @_bau_kron_kernel(%arg0: i32, %arg1: i32, %arg2: memref<1x8x256xf32, #tpu.memory_space<vmem>>, %arg3: memref<256x1024xf32, #tpu.memory_space<vmem>>, %arg4: memref<1x2x1024xf32, #tpu.memory_space<vmem>>) attributes {dimension_semantics = [#tpu.dimension_semantics<parallel>, #tpu.dimension_semantics<parallel>], iteration_bounds = array<i64: 2, 1>, scalar_prefetch = 0 : i64, scratch_operands = 0 : i64, tpu.core_type = #tpu.core_type<tc>, window_params = [{transform_indices = @transform_0, window_bounds = array<i64: 1, 8, 256>}, {pipeline_mode = #tpu.pipeline_mode<synchronous>, transform_indices = @transform_1, window_bounds = array<i64: 256, 1024>}, {transform_indices = @transform_2, window_bounds = array<i64: 1, 2, 1024>}]} {
    %c0 = arith.constant 0 : index
    %c0_0 = arith.constant 0 : index
    %c0_1 = arith.constant 0 : index
    %0 = vector.load %arg2[%c0, %c0_0, %c0_1] : memref<1x8x256xf32, #tpu.memory_space<vmem>>, vector<1x8x256xf32>
    %1 = vector.shape_cast %0 : vector<1x8x256xf32> to vector<8x256xf32>
    %2 = vector.shape_cast %1 : vector<8x256xf32> to vector<2x4x256xf32>
    %cst = arith.constant dense<0.000000e+00> : vector<2x256xf32>
    %3 = vector.multi_reduction <add>, %2, %cst [1] : vector<2x4x256xf32> to vector<2x256xf32>
    %c0_2 = arith.constant 0 : index
    %c0_3 = arith.constant 0 : index
    %4 = vector.load %arg3[%c0_2, %c0_3] : memref<256x1024xf32, #tpu.memory_space<vmem>>, vector<256x1024xf32>
    %cst_4 = arith.constant dense<0.000000e+00> : vector<2x1024xf32>
    %5 = tpu.matmul %3, %4, %cst_4 {dimension_numbers = #tpu.dot_dimension_numbers<[1], [0], [0], [1], [0, 0, 1, 1], [], []>} : vector<2x256xf32>, vector<256x1024xf32>, vector<2x1024xf32> -> vector<2x1024xf32>
    %c0_5 = arith.constant 0 : index
    %c0_6 = arith.constant 0 : index
    %c0_7 = arith.constant 0 : index
    %6 = vector.load %arg4[%c0_5, %c0_6, %c0_7] : memref<1x2x1024xf32, #tpu.memory_space<vmem>>, vector<1x2x1024xf32>
    %7 = vector.shape_cast %6 : vector<1x2x1024xf32> to vector<2x1024xf32>
    %8 = vector.shape_cast %5 : vector<2x1024xf32> to vector<1x2x1024xf32>
    tpu.vector_store %arg4[%c0_5, %c0_6, %c0_7], %8 {strides = array<i32>} : memref<1x2x1024xf32, #tpu.memory_space<vmem>>, vector<1x2x1024xf32>,
    return
  }
  func.func @transform_0(%arg0: i32, %arg1: i32) -> (i32, i32, i32) {
    %c0_i32 = arith.constant 0 : i32
    %c0_i32_0 = arith.constant 0 : i32
    return %arg0, %arg1, %c0_i32 : i32, i32, i32
  }
  func.func @transform_1(%arg0: i32, %arg1: i32) -> (i32, i32) {
    %c0_i32 = arith.constant 0 : i32
    %c0_i32_0 = arith.constant 0 : i32
    %c0_i32_1 = arith.constant 0 : i32
    return %c0_i32, %c0_i32_0 : i32, i32
  }
  func.func @transform_2(%arg0: i32, %arg1: i32) -> (i32, i32, i32) {
    %c0_i32 = arith.constant 0 : i32
    %c0_i32_0 = arith.constant 0 : i32
    return %arg0, %arg1, %c0_i32 : i32, i32, i32
  }
}

</mosaic_0001>

<llo_original>
// kernel: tpu_custom_call.1
$region0: #{tpu_custom_call.1}
  #allocation0 [shape = 'u32[]', space=smem, size = 0x4, offset = 0x4, fixed_abs, tag = 'smem constant byte address 0x4 - core index']
  #allocation1 [shape = 'u32[72,128]{1,0:T(1,128)}', space=vmem, size = 0x9000, scoped, tag = 'internal scratch']
  %s0 = inlined_call_operand.hbm [shape: f32[2,8,256], index: 0, kind: input, shape index: {}]
  %s1 = inlined_call_operand.hbm [shape: f32[256,1024], index: 1, kind: input, shape index: {}]
  %s2 = inlined_call_operand.hbm [shape: f32[2,2,1024], index: 2, kind: output, shape index: {}]
  %s3 = sld [smem:[#allocation0]]
  $region49: #{tpu_custom_call.1} parent=0
    _
  %s5 = ssub.s32 1, %s3
  %s6 = scalar_select 0, %s5, %s3
  $region1: #{tpu_custom_call.1} parent=0
    #allocation2 [shape = 'u8[16384]{0}', space=vmem, size = 0x4000, scoped, tag = 'input window, operand 0']
    #allocation3 [shape = 's32[2]{0}', space=sflag, size = 0x8, scoped, tag = 'scoped memory for tpu_custom_call.1']
    #allocation4 [shape = 's32[2]{0}', space=sflag, size = 0x8, scoped, tag = 'scoped memory for tpu_custom_call.1']
    #allocation5 [shape = 'u8[1048576]{0}', space=vmem, size = 0x100000, scoped, tag = 'input window, operand 1, single buffered']
    #allocation6 [shape = 's32[1]{0}', space=sflag, size = 0x4, scoped, tag = 'scoped memory for tpu_custom_call.1']
    #allocation7 [shape = 'u8[16384]{0}', space=vmem, size = 0x4000, scoped, tag = 'output window, operand 0']
    %7 = vsyncpa [#allocation3], 0
    %s8 = scalar_lea.sflag [#allocation3], 1
    %9 = vsyncpa %s8, 0
    %10 = vsyncpa [#allocation6], 0
    %11 = vsyncpa [#allocation4], 0
    %s12 = scalar_lea.sflag [#allocation4], 1
    %13 = vsyncpa %s12, 0
    loop: start=0, step=1, limit=4
    $region2: #{tpu_custom_call.1} parent=1 // loop_pre_header
      _
    $region3: #{tpu_custom_call.1} parent=1 // loop_header
      %s15 = sphi 0, %s19
      %p16 = scmp.ge.s32.totalorder %s15, 4
      %s22 = sphi 0, %s34
      %s23 = sphi 0, %s30
      %s24 = sphi 0, %s22
      %s25 = sphi 0, %s23
      %s26 = sphi 0, %s24
      %s27 = sphi 0, %s25
      %s39 = sphi 0, %s41
      %s42 = sphi 0, %s39
      %s43 = sphi 0, %s42
      %s59 = sphi 0, %s43
      %s63 = sphi 0, %s63
      %s65 = sphi 0, %s63
      %s66 = sphi 0, %s65
      %s80 = sphi 0, %s66
      %s88 = sphi 0, %s90
      %s91 = sphi 0, %s88
      %s92 = sphi 0, %s91
      %s108 = sphi 0, %s92
    $region4: #{tpu_custom_call.1} parent=1 // loop_header_branch
      %18 = sbr.rel (%p16) target = $region8
    $region5: #{tpu_custom_call.1} parent=1 // loop_body
      %s20 = ssub.s32 %s15, 1
      %s21 = ssub.s32 %s15, 2
      %s28 = sadd.s32 1, %s23
      %p29 = scmp.ge.s32.totalorder %s28, 1
      %s30 = scalar_select %p29, 0, %s28
      %s31 = sadd.s32 1, %s22
      %s32 = scalar_select %p29, %s31, %s22
      %p33 = scmp.ge.s32.totalorder %s32, 2
      %s34 = scalar_select %p33, 0, %s32
      %s35 = ssub.s32 %s22, %s34
      %s36 = ssub.s32 %s23, %s30
      %s37 = sor.u32 %s35, %s36
      %p38 = scmp.eq.s32.totalorder %s37, 0
      %s40 = sadd.s32 %s39, 1
      %s41 = scalar_select %p38, %s39, %s40
      %p44 = pneg %p38
      %p45 = scmp.eq.s32.totalorder %s15, 1
      %p46 = por %p44, %p45
      %p47 = scmp.ne.s32.totalorder %s39, %s42
      %p48 = scmp.eq.s32.totalorder %s15, 0
      %p49 = por %p47, %p48
      %p50 = scmp.ne.s32.totalorder %s39, %s42
      %p51 = scmp.eq.s32.totalorder %s20, 1
      %p52 = por %p50, %p51
      %p53 = scmp.ne.s32.totalorder %s42, %s43
      %p54 = scmp.eq.s32.totalorder %s20, 0
      %p55 = por %p53, %p54
      %p56 = scmp.ne.s32.totalorder %s42, %s43
      %p57 = scmp.eq.s32.totalorder %s21, 1
      %p58 = por %p56, %p57
      %p60 = scmp.ne.s32.totalorder %s43, %s59
      %p61 = scmp.eq.s32.totalorder %s21, 0
      %p62 = por %p60, %p61
      %s64 = sadd.s32 %s63, 1
      %p67 = scmp.eq.s32.totalorder %s15, 1
      %p68 = scmp.ne.s32.totalorder %s63, %s65
      %p69 = scmp.eq.s32.totalorder %s15, 0
      %p70 = por %p68, %p69
      %p71 = scmp.ne.s32.totalorder %s63, %s65
      %p72 = scmp.eq.s32.totalorder %s20, 1
      %p73 = por %p71, %p72
      %p74 = scmp.ne.s32.totalorder %s65, %s66
      %p75 = scmp.eq.s32.totalorder %s20, 0
      %p76 = por %p74, %p75
      %p77 = scmp.ne.s32.totalorder %s65, %s66
      %p78 = scmp.eq.s32.totalorder %s21, 1
      %p79 = por %p77, %p78
      %p81 = scmp.ne.s32.totalorder %s66, %s80
      %p82 = scmp.eq.s32.totalorder %s21, 0
      %p83 = por %p81, %p82
      %s84 = ssub.s32 %s22, %s34
      %s85 = ssub.s32 %s23, %s30
      %s86 = sor.u32 %s84, %s85
      %p87 = scmp.eq.s32.totalorder %s86, 0
      %s89 = sadd.s32 %s88, 1
      %s90 = scalar_select %p87, %s88, %s89
      %p93 = pneg %p87
      %p94 = scmp.eq.s32.totalorder %s15, 1
      %p95 = por %p93, %p94
      %p96 = scmp.ne.s32.totalorder %s88, %s91
      %p97 = scmp.eq.s32.totalorder %s15, 0
      %p98 = por %p96, %p97
      %p99 = scmp.ne.s32.totalorder %s88, %s91
      %p100 = scmp.eq.s32.totalorder %s20, 1
      %p101 = por %p99, %p100
      %p102 = scmp.ne.s32.totalorder %s91, %s92
      %p103 = scmp.eq.s32.totalorder %s20, 0
      %p104 = por %p102, %p103
      %p105 = scmp.ne.s32.totalorder %s91, %s92
      %p106 = scmp.eq.s32.totalorder %s21, 1
      %p107 = por %p105, %p106
      %p109 = scmp.ne.s32.totalorder %s92, %s108
      %p110 = scmp.eq.s32.totalorder %s21, 0
      %p111 = por %p109, %p110
      %p112 = scmp.le.s32.totalorder 1, %s15
      %p113 = scmp.lt.s32.totalorder %s15, 3
      %p114 = pnand %p112, %p113
      %p115 = pneg %p114
      // Predicated region
      $region9: #{tpu_custom_call.1} parent=5 // pred_check
        _
      $region10: #{tpu_custom_call.1} parent=5 // pred_check_branch
        %117 = sbr.rel (%p114) target = $region12
      $region11: #{tpu_custom_call.1} parent=5 // pred_region
        %s118 = ssub.s32 %s15, 1
        // Predicated region
        $region13: #{tpu_custom_call.1} parent=11 // pred_check
          %p119 = pneg %p76
        $region14: #{tpu_custom_call.1} parent=11 // pred_check_branch
          %121 = sbr.rel (%p119) target = $region16
        $region15: #{tpu_custom_call.1} parent=11 // pred_region
          %123 = vsyncadd [#allocation6], 0
          %s124 = sshll.u32 %s1, 4
          %s125 = int_to_ptr.hbm [resolvable:$true] %s124
          %s126 = sshll.u32 [#allocation5], 4
          %s127 = int_to_ptr.vmem [resolvable:$true] %s126
          %132 = dma.hbm_to_vmem [thread:$0]  %s125, 32768, %s127, [#allocation6], 1024, 1024, 64
        $region16: #{tpu_custom_call.1} parent=11 // pred_fallthru
          _
      $region12: #{tpu_custom_call.1} parent=5 // pred_fallthru
        _
      %p133 = scmp.lt.s32.totalorder %s15, 2
      // Predicated region
      $region17: #{tpu_custom_call.1} parent=5 // pred_check
        %p134 = pneg %p133
      $region18: #{tpu_custom_call.1} parent=5 // pred_check_branch
        %136 = sbr.rel (%p134) target = $region20
      $region19: #{tpu_custom_call.1} parent=5 // pred_region
        // Predicated region
        $region21: #{tpu_custom_call.1} parent=19 // pred_check
          %p137 = pneg %p49
        $region22: #{tpu_custom_call.1} parent=19 // pred_check_branch
          %139 = sbr.rel (%p137) target = $region24
        $region23: #{tpu_custom_call.1} parent=19 // pred_region
          %s140 = sand.u32 %s39, 1
          %s141 = scalar_lea.sflag [#allocation3], %s140
          %s142 = sand.u32 %s39, 1
          %s143 = smul.addr %s142, 16
          %s144 = scalar_lea.vmem [#allocation2], %s143
          %146 = vsyncadd %s141, 0
          %s147 = smul.addr %s23, 2
          %s148 = smul.addr %s22, 2
          %s149 = sadd.s32 %s147, %s148
          %s150 = smul.addr %s149, 8
          %s151 = scalar_lea.hbm %s0, %s150
          %s153 = sshll.u32 %s151, 4
          %s154 = int_to_ptr.hbm [resolvable:$true] %s153
          %s155 = sshll.u32 %s144, 4
          %s156 = int_to_ptr.vmem [resolvable:$true] %s155
          %158 = dma.hbm_to_vmem [thread:$0]  %s154, 256, %s156, %s141
        $region24: #{tpu_custom_call.1} parent=19 // pred_fallthru
          _
      $region20: #{tpu_custom_call.1} parent=5 // pred_fallthru
        _
      %p159 = scmp.le.s32.totalorder 1, %s15
      %p160 = scmp.lt.s32.totalorder %s15, 3
      %p161 = pnand %p159, %p160
      %p162 = pneg %p161
      // Predicated region
      $region25: #{tpu_custom_call.1} parent=5 // pred_check
        _
      $region26: #{tpu_custom_call.1} parent=5 // pred_check_branch
        %164 = sbr.rel (%p161) target = $region28
      $region27: #{tpu_custom_call.1} parent=5 // pred_region
        %s165 = ssub.s32 %s15, 1
        %s166 = sand.u32 %s42, 1
        %s167 = scalar_lea.sflag [#allocation3], %s166
        %s168 = sand.u32 %s42, 1
        %s169 = smul.addr %s168, 16
        %s170 = scalar_lea.vmem [#allocation2], %s169
        // Predicated region
        $region29: #{tpu_custom_call.1} parent=27 // pred_check
          %p171 = pneg %p55
        $region30: #{tpu_custom_call.1} parent=27 // pred_check_branch
          %173 = sbr.rel (%p171) target = $region32
        $region31: #{tpu_custom_call.1} parent=27 // pred_region
          %175 = dma.done %s167, 256
        $region32: #{tpu_custom_call.1} parent=27 // pred_fallthru
          _
        // Predicated region
        $region33: #{tpu_custom_call.1} parent=27 // pred_check
          %p176 = pneg %p76
        $region34: #{tpu_custom_call.1} parent=27 // pred_check_branch
          %178 = sbr.rel (%p176) target = $region36
        $region35: #{tpu_custom_call.1} parent=27 // pred_region
          %180 = dma.done [#allocation6], 32768
        $region36: #{tpu_custom_call.1} parent=27 // pred_fallthru
          _
        %s181 = sand.u32 %s42, 1
        %s182 = scalar_lea.sflag [#allocation3], %s181
        %s183 = sand.u32 %s42, 1
        %s184 = smul.addr %s183, 16
        %s185 = scalar_lea.vmem [#allocation2], %s184
        %p186 = pneg %p55
        %p187 = pneg %p52
        %p188 = pneg %p76
        %p189 = pneg %p73
        %p190 = pneg %p104
        %p191 = pneg %p101
        %s192 = sand.u32 %s91, 1
        %s193 = scalar_lea.sflag [#allocation4], %s192
        %s194 = sand.u32 %s91, 1
        %s195 = smul.addr %s194, 16
        %s196 = scalar_lea.vmem [#allocation7], %s195
        %v197 = vld [vmem:[%s170] sm:$0xff]
        %v198 = vld [vmem:[%s170 + $0x8] sm:$0xff]
        %v201 = vrot.slane %v198, 4
        %vm202 = vcmask 1043456
        %v203 = vsel %vm202, %v197, %v201
        %v204 = vsel %vm202, %v201, %v197
        %v205 = vrot.slane %v204, 4
        %206 = vst [vmem:[#allocation1] ss:$2 sm:$0xff] %v203
        %v207 = vld.sshfl [vmem:[#allocation1] sm:$0xff pattern:$0x75316420]
        %v208 = vld.sshfl [vmem:[#allocation1 + $0x8] sm:$0xff pattern:$0x75316420]
        %s209 = scalar_lea.vmem [#allocation1], 16
        %210 = vst [vmem:[%s209] ss:$2 sm:$0xff] %v205
        %v211 = vld.sshfl [vmem:[#allocation1 + $0x10] sm:$0xff pattern:$0x75316420]
        %v212 = vld.sshfl [vmem:[#allocation1 + $0x18] sm:$0xff pattern:$0x75316420]
        %v217 = vsel %vm202, %v207, 0.0
        %v218 = vrot.slane %v217, 4
        %v219 = vadd.f32 %v217, %v218
        %v220 = vrot.slane %v219, 2
        %v221 = vadd.f32 %v219, %v220
        %v222 = vrot.slane %v221, 1
        %v223 = vadd.f32 %v221, %v222
        %v224 = vsel %vm202, %v208, 0.0
        %v225 = vrot.slane %v224, 4
        %v226 = vadd.f32 %v224, %v225
        %v227 = vrot.slane %v226, 2
        %v228 = vadd.f32 %v226, %v227
        %v229 = vrot.slane %v228, 1
        %v230 = vadd.f32 %v228, %v229
        %v231 = vsel %vm202, %v211, 0.0
        %v232 = vrot.slane %v231, 4
        %v233 = vadd.f32 %v231, %v232
        %v234 = vrot.slane %v233, 2
        %v235 = vadd.f32 %v233, %v234
        %v236 = vrot.slane %v235, 1
        %v237 = vadd.f32 %v235, %v236
        %v238 = vsel %vm202, %v212, 0.0
        %v239 = vrot.slane %v238, 4
        %v240 = vadd.f32 %v238, %v239
        %v241 = vrot.slane %v240, 2
        %v242 = vadd.f32 %v240, %v241
        %v243 = vrot.slane %v242, 1
        %v244 = vadd.f32 %v242, %v243
        %v245 = vld [vmem:[#allocation5] sm:$0xff]
        %v246 = vld [vmem:[#allocation5 + $0x8] sm:$0xff]
        %v247 = vld [vmem:[#allocation5 + $0x10] sm:$0xff]
        %v248 = vld [vmem:[#allocation5 + $0x18] sm:$0xff]
        %v249 = vld [vmem:[#allocation5 + $0x20] sm:$0xff]
        %v250 = vld [vmem:[#allocation5 + $0x28] sm:$0xff]
        %v251 = vld [vmem:[#allocation5 + $0x30] sm:$0xff]
        %v252 = vld [vmem:[#allocation5 + $0x38] sm:$0xff]
        %v253 = vld [vmem:[#allocation5 + $0x40] sm:$0xff]
        %v254 = vld [vmem:[#allocation5 + $0x48] sm:$0xff]
        %v255 = vld [vmem:[#allocation5 + $0x50] sm:$0xff]
        %v256 = vld [vmem:[#allocation5 + $0x58] sm:$0xff]
        %v257 = vld [vmem:[#allocation5 + $0x60] sm:$0xff]
        %v258 = vld [vmem:[#allocation5 + $0x68] sm:$0xff]
        %v259 = vld [vmem:[#allocation5 + $0x70] sm:$0xff]
        %v260 = vld [vmem:[#allocation5 + $0x78] sm:$0xff]
        %v261 = vld [vmem:[#allocation5 + $0x80] sm:$0xff]
        %v262 = vld [vmem:[#allocation5 + $0x88] sm:$0xff]
        %v263 = vld [vmem:[#allocation5 + $0x90] sm:$0xff]
        %v264 = vld [vmem:[#allocation5 + $0x98] sm:$0xff]
        %v265 = vld [vmem:[#allocation5 + $0xa0] sm:$0xff]
        %v266 = vld [vmem:[#allocation5 + $0xa8] sm:$0xff]
        %v267 = vld [vmem:[#allocation5 + $0xb0] sm:$0xff]
        %v268 = vld [vmem:[#allocation5 + $0xb8] sm:$0xff]
        %v269 = vld [vmem:[#allocation5 + $0xc0] sm:$0xff]
        %v270 = vld [vmem:[#allocation5 + $0xc8] sm:$0xff]
        %v271 = vld [vmem:[#allocation5 + $0xd0] sm:$0xff]
        %v272 = vld [vmem:[#allocation5 + $0xd8] sm:$0xff]
        %v273 = vld [vmem:[#allocation5 + $0xe0] sm:$0xff]
        %v274 = vld [vmem:[#allocation5 + $0xe8] sm:$0xff]
        %v275 = vld [vmem:[#allocation5 + $0xf0] sm:$0xff]
        %v276 = vld [vmem:[#allocation5 + $0xf8] sm:$0xff]
        %v277 = vld [vmem:[#allocation5 + $0x100] sm:$0xff]
        %v278 = vld [vmem:[#allocation5 + $0x108] sm:$0xff]
        %v279 = vld [vmem:[#allocation5 + $0x110] sm:$0xff]
        %v280 = vld [vmem:[#allocation5 + $0x118] sm:$0xff]
        %v281 = vld [vmem:[#allocation5 + $0x120] sm:$0xff]
        %v282 = vld [vmem:[#allocation5 + $0x128] sm:$0xff]
        %v283 = vld [vmem:[#allocation5 + $0x130] sm:$0xff]
        %v284 = vld [vmem:[#allocation5 + $0x138] sm:$0xff]
        %v285 = vld [vmem:[#allocation5 + $0x140] sm:$0xff]
        %v286 = vld [vmem:[#allocation5 + $0x148] sm:$0xff]
        %v287 = vld [vmem:[#allocation5 + $0x150] sm:$0xff]
        %v288 = vld [vmem:[#allocation5 + $0x158] sm:$0xff]
        %v289 = vld [vmem:[#allocation5 + $0x160] sm:$0xff]
        %v290 = vld [vmem:[#allocation5 + $0x168] sm:$0xff]
        %v291 = vld [vmem:[#allocation5 + $0x170] sm:$0xff]
        %v292 = vld [vmem:[#allocation5 + $0x178] sm:$0xff]
        %v293 = vld [vmem:[#allocation5 + $0x180] sm:$0xff]
        %v294 = vld [vmem:[#allocation5 + $0x188] sm:$0xff]
        %v295 = vld [vmem:[#allocation5 + $0x190] sm:$0xff]
        %v296 = vld [vmem:[#allocation5 + $0x198] sm:$0xff]
        %v297 = vld [vmem:[#allocation5 + $0x1a0] sm:$0xff]
        %v298 = vld [vmem:[#allocation5 + $0x1a8] sm:$0xff]
        %v299 = vld [vmem:[#allocation5 + $0x1b0] sm:$0xff]
        %v300 = vld [vmem:[#allocation5 + $0x1b8] sm:$0xff]
        %v301 = vld [vmem:[#allocation5 + $0x1c0] sm:$0xff]
        %v302 = vld [vmem:[#allocation5 + $0x1c8] sm:$0xff]
        %v303 = vld [vmem:[#allocation5 + $0x1d0] sm:$0xff]
        %v304 = vld [vmem:[#allocation5 + $0x1d8] sm:$0xff]
        %v305 = vld [vmem:[#allocation5 + $0x1e0] sm:$0xff]
        %v306 = vld [vmem:[#allocation5 + $0x1e8] sm:$0xff]
        %v307 = vld [vmem:[#allocation5 + $0x1f0] sm:$0xff]
        %v308 = vld [vmem:[#allocation5 + $0x1f8] sm:$0xff]
        %v309 = vld [vmem:[#allocation5 + $0x200] sm:$0xff]
        %v310 = vld [vmem:[#allocation5 + $0x208] sm:$0xff]
        %v311 = vld [vmem:[#allocation5 + $0x210] sm:$0xff]
        %v312 = vld [vmem:[#allocation5 + $0x218] sm:$0xff]
        %v313 = vld [vmem:[#allocation5 + $0x220] sm:$0xff]
        %v314 = vld [vmem:[#allocation5 + $0x228] sm:$0xff]
        %v315 = vld [vmem:[#allocation5 + $0x230] sm:$0xff]
        %v316 = vld [vmem:[#allocation5 + $0x238] sm:$0xff]
        %v317 = vld [vmem:[#allocation5 + $0x240] sm:$0xff]
        %v318 = vld [vmem:[#allocation5 + $0x248] sm:$0xff]
        %v319 = vld [vmem:[#allocation5 + $0x250] sm:$0xff]
        %v320 = vld [vmem:[#allocation5 + $0x258] sm:$0xff]
        %v321 = vld [vmem:[#allocation5 + $0x260] sm:$0xff]
        %v322 = vld [vmem:[#allocation5 + $0x268] sm:$0xff]
        %v323 = vld [vmem:[#allocation5 + $0x270] sm:$0xff]
        %v324 = vld [vmem:[#allocation5 + $0x278] sm:$0xff]
        %v325 = vld [vmem:[#allocation5 + $0x280] sm:$0xff]
        %v326 = vld [vmem:[#allocation5 + $0x288] sm:$0xff]
        %v327 = vld [vmem:[#allocation5 + $0x290] sm:$0xff]
        %v328 = vld [vmem:[#allocation5 + $0x298] sm:$0xff]
        %v329 = vld [vmem:[#allocation5 + $0x2a0] sm:$0xff]
        %v330 = vld [vmem:[#allocation5 + $0x2a8] sm:$0xff]
        %v331 = vld [vmem:[#allocation5 + $0x2b0] sm:$0xff]
        %v332 = vld [vmem:[#allocation5 + $0x2b8] sm:$0xff]
        %v333 = vld [vmem:[#allocation5 + $0x2c0] sm:$0xff]
        %v334 = vld [vmem:[#allocation5 + $0x2c8] sm:$0xff]
        %v335 = vld [vmem:[#allocation5 + $0x2d0] sm:$0xff]
        %v336 = vld [vmem:[#allocation5 + $0x2d8] sm:$0xff]
        %v337 = vld [vmem:[#allocation5 + $0x2e0] sm:$0xff]
        %v338 = vld [vmem:[#allocation5 + $0x2e8] sm:$0xff]
        %v339 = vld [vmem:[#allocation5 + $0x2f0] sm:$0xff]
        %v340 = vld [vmem:[#allocation5 + $0x2f8] sm:$0xff]
        %v341 = vld [vmem:[#allocation5 + $0x300] sm:$0xff]
        %v342 = vld [vmem:[#allocation5 + $0x308] sm:$0xff]
        %v343 = vld [vmem:[#allocation5 + $0x310] sm:$0xff]
        %v344 = vld [vmem:[#allocation5 + $0x318] sm:$0xff]
        %v345 = vld [vmem:[#allocation5 + $0x320] sm:$0xff]
        %v346 = vld [vmem:[#allocation5 + $0x328] sm:$0xff]
        %v347 = vld [vmem:[#allocation5 + $0x330] sm:$0xff]
        %v348 = vld [vmem:[#allocation5 + $0x338] sm:$0xff]
        %v349 = vld [vmem:[#allocation5 + $0x340] sm:$0xff]
        %v350 = vld [vmem:[#allocation5 + $0x348] sm:$0xff]
        %v351 = vld [vmem:[#allocation5 + $0x350] sm:$0xff]
        %v352 = vld [vmem:[#allocation5 + $0x358] sm:$0xff]
        %v353 = vld [vmem:[#allocation5 + $0x360] sm:$0xff]
        %v354 = vld [vmem:[#allocation5 + $0x368] sm:$0xff]
        %v355 = vld [vmem:[#allocation5 + $0x370] sm:$0xff]
        %v356 = vld [vmem:[#allocation5 + $0x378] sm:$0xff]
        %v357 = vld [vmem:[#allocation5 + $0x380] sm:$0xff]
        %v358 = vld [vmem:[#allocation5 + $0x388] sm:$0xff]
        %v359 = vld [vmem:[#allocation5 + $0x390] sm:$0xff]
        %v360 = vld [vmem:[#allocation5 + $0x398] sm:$0xff]
        %v361 = vld [vmem:[#allocation5 + $0x3a0] sm:$0xff]
        %v362 = vld [vmem:[#allocation5 + $0x3a8] sm:$0xff]
        %v363 = vld [vmem:[#allocation5 + $0x3b0] sm:$0xff]
        %v364 = vld [vmem:[#allocation5 + $0x3b8] sm:$0xff]
        %v365 = vld [vmem:[#allocation5 + $0x3c0] sm:$0xff]
        %v366 = vld [vmem:[#allocation5 + $0x3c8] sm:$0xff]
        %v367 = vld [vmem:[#allocation5 + $0x3d0] sm:$0xff]
        %v368 = vld [vmem:[#allocation5 + $0x3d8] sm:$0xff]
        %v369 = vld [vmem:[#allocation5 + $0x3e0] sm:$0xff]
        %v370 = vld [vmem:[#allocation5 + $0x3e8] sm:$0xff]
        %v371 = vld [vmem:[#allocation5 + $0x3f0] sm:$0xff]
        %v372 = vld [vmem:[#allocation5 + $0x3f8] sm:$0xff]
        %v373 = vld [vmem:[#allocation5 + $0x400] sm:$0xff]
        %v374 = vld [vmem:[#allocation5 + $0x408] sm:$0xff]
        %v375 = vld [vmem:[#allocation5 + $0x410] sm:$0xff]
        %v376 = vld [vmem:[#allocation5 + $0x418] sm:$0xff]
        %v377 = vld [vmem:[#allocation5 + $0x420] sm:$0xff]
        %v378 = vld [vmem:[#allocation5 + $0x428] sm:$0xff]
        %v379 = vld [vmem:[#allocation5 + $0x430] sm:$0xff]
        %v380 = vld [vmem:[#allocation5 + $0x438] sm:$0xff]
        %v381 = vld [vmem:[#allocation5 + $0x440] sm:$0xff]
        %v382 = vld [vmem:[#allocation5 + $0x448] sm:$0xff]
        %v383 = vld [vmem:[#allocation5 + $0x450] sm:$0xff]
        %v384 = vld [vmem:[#allocation5 + $0x458] sm:$0xff]
        %v385 = vld [vmem:[#allocation5 + $0x460] sm:$0xff]
        %v386 = vld [vmem:[#allocation5 + $0x468] sm:$0xff]
        %v387 = vld [vmem:[#allocation5 + $0x470] sm:$0xff]
        %v388 = vld [vmem:[#allocation5 + $0x478] sm:$0xff]
        %v389 = vld [vmem:[#allocation5 + $0x480] sm:$0xff]
        %v390 = vld [vmem:[#allocation5 + $0x488] sm:$0xff]
        %v391 = vld [vmem:[#allocation5 + $0x490] sm:$0xff]
        %v392 = vld [vmem:[#allocation5 + $0x498] sm:$0xff]
        %v393 = vld [vmem:[#allocation5 + $0x4a0] sm:$0xff]
        %v394 = vld [vmem:[#allocation5 + $0x4a8] sm:$0xff]
        %v395 = vld [vmem:[#allocation5 + $0x4b0] sm:$0xff]
        %v396 = vld [vmem:[#allocation5 + $0x4b8] sm:$0xff]
        %v397 = vld [vmem:[#allocation5 + $0x4c0] sm:$0xff]
        %v398 = vld [vmem:[#allocation5 + $0x4c8] sm:$0xff]
        %v399 = vld [vmem:[#allocation5 + $0x4d0] sm:$0xff]
        %v400 = vld [vmem:[#allocation5 + $0x4d8] sm:$0xff]
        %v401 = vld [vmem:[#allocation5 + $0x4e0] sm:$0xff]
        %v402 = vld [vmem:[#allocation5 + $0x4e8] sm:$0xff]
        %v403 = vld [vmem:[#allocation5 + $0x4f0] sm:$0xff]
        %v404 = vld [vmem:[#allocation5 + $0x4f8] sm:$0xff]
        %v405 = vld [vmem:[#allocation5 + $0x500] sm:$0xff]
        %v406 = vld [vmem:[#allocation5 + $0x508] sm:$0xff]
        %v407 = vld [vmem:[#allocation5 + $0x510] sm:$0xff]
        %v408 = vld [vmem:[#allocation5 + $0x518] sm:$0xff]
        %v409 = vld [vmem:[#allocation5 + $0x520] sm:$0xff]
        %v410 = vld [vmem:[#allocation5 + $0x528] sm:$0xff]
        %v411 = vld [vmem:[#allocation5 + $0x530] sm:$0xff]
        %v412 = vld [vmem:[#allocation5 + $0x538] sm:$0xff]
        %v413 = vld [vmem:[#allocation5 + $0x540] sm:$0xff]
        %v414 = vld [vmem:[#allocation5 + $0x548] sm:$0xff]
        %v415 = vld [vmem:[#allocation5 + $0x550] sm:$0xff]
        %v416 = vld [vmem:[#allocation5 + $0x558] sm:$0xff]
        %v417 = vld [vmem:[#allocation5 + $0x560] sm:$0xff]
        %v418 = vld [vmem:[#allocation5 + $0x568] sm:$0xff]
        %v419 = vld [vmem:[#allocation5 + $0x570] sm:$0xff]
        %v420 = vld [vmem:[#allocation5 + $0x578] sm:$0xff]
        %v421 = vld [vmem:[#allocation5 + $0x580] sm:$0xff]
        %v422 = vld [vmem:[#allocation5 + $0x588] sm:$0xff]
        %v423 = vld [vmem:[#allocation5 + $0x590] sm:$0xff]
        %v424 = vld [vmem:[#allocation5 + $0x598] sm:$0xff]
        %v425 = vld [vmem:[#allocation5 + $0x5a0] sm:$0xff]
        %v426 = vld [vmem:[#allocation5 + $0x5a8] sm:$0xff]
        %v427 = vld [vmem:[#allocation5 + $0x5b0] sm:$0xff]
        %v428 = vld [vmem:[#allocation5 + $0x5b8] sm:$0xff]
        %v429 = vld [vmem:[#allocation5 + $0x5c0] sm:$0xff]
        %v430 = vld [vmem:[#allocation5 + $0x5c8] sm:$0xff]
        %v431 = vld [vmem:[#allocation5 + $0x5d0] sm:$0xff]
        %v432 = vld [vmem:[#allocation5 + $0x5d8] sm:$0xff]
        %v433 = vld [vmem:[#allocation5 + $0x5e0] sm:$0xff]
        %v434 = vld [vmem:[#allocation5 + $0x5e8] sm:$0xff]
        %v435 = vld [vmem:[#allocation5 + $0x5f0] sm:$0xff]
        %v436 = vld [vmem:[#allocation5 + $0x5f8] sm:$0xff]
        %v437 = vld [vmem:[#allocation5 + $0x600] sm:$0xff]
        %v438 = vld [vmem:[#allocation5 + $0x608] sm:$0xff]
        %v439 = vld [vmem:[#allocation5 + $0x610] sm:$0xff]
        %v440 = vld [vmem:[#allocation5 + $0x618] sm:$0xff]
        %v441 = vld [vmem:[#allocation5 + $0x620] sm:$0xff]
        %v442 = vld [vmem:[#allocation5 + $0x628] sm:$0xff]
        %v443 = vld [vmem:[#allocation5 + $0x630] sm:$0xff]
        %v444 = vld [vmem:[#allocation5 + $0x638] sm:$0xff]
        %v445 = vld [vmem:[#allocation5 + $0x640] sm:$0xff]
        %v446 = vld [vmem:[#allocation5 + $0x648] sm:$0xff]
        %v447 = vld [vmem:[#allocation5 + $0x650] sm:$0xff]
        %v448 = vld [vmem:[#allocation5 + $0x658] sm:$0xff]
        %v449 = vld [vmem:[#allocation5 + $0x660] sm:$0xff]
        %v450 = vld [vmem:[#allocation5 + $0x668] sm:$0xff]
        %v451 = vld [vmem:[#allocation5 + $0x670] sm:$0xff]
        %v452 = vld [vmem:[#allocation5 + $0x678] sm:$0xff]
        %v453 = vld [vmem:[#allocation5 + $0x680] sm:$0xff]
        %v454 = vld [vmem:[#allocation5 + $0x688] sm:$0xff]
        %v455 = vld [vmem:[#allocation5 + $0x690] sm:$0xff]
        %v456 = vld [vmem:[#allocation5 + $0x698] sm:$0xff]
        %v457 = vld [vmem:[#allocation5 + $0x6a0] sm:$0xff]
        %v458 = vld [vmem:[#allocation5 + $0x6a8] sm:$0xff]
        %v459 = vld [vmem:[#allocation5 + $0x6b0] sm:$0xff]
        %v460 = vld [vmem:[#allocation5 + $0x6b8] sm:$0xff]
        %v461 = vld [vmem:[#allocation5 + $0x6c0] sm:$0xff]
        %v462 = vld [vmem:[#allocation5 + $0x6c8] sm:$0xff]
        %v463 = vld [vmem:[#allocation5 + $0x6d0] sm:$0xff]
        %v464 = vld [vmem:[#allocation5 + $0x6d8] sm:$0xff]
        %v465 = vld [vmem:[#allocation5 + $0x6e0] sm:$0xff]
        %v466 = vld [vmem:[#allocation5 + $0x6e8] sm:$0xff]
        %v467 = vld [vmem:[#allocation5 + $0x6f0] sm:$0xff]
        %v468 = vld [vmem:[#allocation5 + $0x6f8] sm:$0xff]
        %v469 = vld [vmem:[#allocation5 + $0x700] sm:$0xff]
        %v470 = vld [vmem:[#allocation5 + $0x708] sm:$0xff]
        %v471 = vld [vmem:[#allocation5 + $0x710] sm:$0xff]
        %v472 = vld [vmem:[#allocation5 + $0x718] sm:$0xff]
        %v473 = vld [vmem:[#allocation5 + $0x720] sm:$0xff]
        %v474 = vld [vmem:[#allocation5 + $0x728] sm:$0xff]
        %v475 = vld [vmem:[#allocation5 + $0x730] sm:$0xff]
        %v476 = vld [vmem:[#allocation5 + $0x738] sm:$0xff]
        %v477 = vld [vmem:[#allocation5 + $0x740] sm:$0xff]
        %v478 = vld [vmem:[#allocation5 + $0x748] sm:$0xff]
        %v479 = vld [vmem:[#allocation5 + $0x750] sm:$0xff]
        %v480 = vld [vmem:[#allocation5 + $0x758] sm:$0xff]
        %v481 = vld [vmem:[#allocation5 + $0x760] sm:$0xff]
        %v482 = vld [vmem:[#allocation5 + $0x768] sm:$0xff]
        %v483 = vld [vmem:[#allocation5 + $0x770] sm:$0xff]
        %v484 = vld [vmem:[#allocation5 + $0x778] sm:$0xff]
        %v485 = vld [vmem:[#allocation5 + $0x780] sm:$0xff]
        %v486 = vld [vmem:[#allocation5 + $0x788] sm:$0xff]
        %v487 = vld [vmem:[#allocation5 + $0x790] sm:$0xff]
        %v488 = vld [vmem:[#allocation5 + $0x798] sm:$0xff]
        %v489 = vld [vmem:[#allocation5 + $0x7a0] sm:$0xff]
        %v490 = vld [vmem:[#allocation5 + $0x7a8] sm:$0xff]
        %v491 = vld [vmem:[#allocation5 + $0x7b0] sm:$0xff]
        %v492 = vld [vmem:[#allocation5 + $0x7b8] sm:$0xff]
        %v493 = vld [vmem:[#allocation5 + $0x7c0] sm:$0xff]
        %v494 = vld [vmem:[#allocation5 + $0x7c8] sm:$0xff]
        %v495 = vld [vmem:[#allocation5 + $0x7d0] sm:$0xff]
        %v496 = vld [vmem:[#allocation5 + $0x7d8] sm:$0xff]
        %v497 = vld [vmem:[#allocation5 + $0x7e0] sm:$0xff]
        %v498 = vld [vmem:[#allocation5 + $0x7e8] sm:$0xff]
        %v499 = vld [vmem:[#allocation5 + $0x7f0] sm:$0xff]
        %v500 = vld [vmem:[#allocation5 + $0x7f8] sm:$0xff]
        %vm505 = vcmask 1041409
        %v506 = vsel %vm505, %v237, %v223
        %v507 = vsel %vm505, %v244, %v230
        %510 = vmatpush.msra.mxu0 %v365
        %511 = vmatpush.msra.mxu0 %v357
        %512 = vmatpush.msra.mxu0 %v349
        %513 = vmatpush.msra.mxu0 %v341
        %514 = vmatpush.msra.mxu0 %v333
        %515 = vmatpush.msra.mxu0 %v325
        %516 = vmatpush.msra.mxu0 %v317
        %517 = vmatpush.msra.mxu0 %v309
        %518 = vmatpush.msra.mxu0 %v301
        %519 = vmatpush.msra.mxu0 %v293
        %520 = vmatpush.msra.mxu0 %v285
        %521 = vmatpush.msra.mxu0 %v277
        %522 = vmatpush.msra.mxu0 %v269
        %523 = vmatpush.msra.mxu0 %v261
        %524 = vmatpush.msra.mxu0 %v253
        %525 = vmatpush.msra.mxu0 %v245
        %526 = vmatmul.f32.gmra.mxu0 %v506
        %v527 = vpop.f32.mrf.mxu0
        %v528 = vadd.f32 0.0, %v527
        %529 = vdwg.mxu0
        %530 = vmatpush.msra.mxu0 %v493
        %531 = vmatpush.msra.mxu0 %v485
        %532 = vmatpush.msra.mxu0 %v477
        %533 = vmatpush.msra.mxu0 %v469
        %534 = vmatpush.msra.mxu0 %v461
        %535 = vmatpush.msra.mxu0 %v453
        %536 = vmatpush.msra.mxu0 %v445
        %537 = vmatpush.msra.mxu0 %v437
        %538 = vmatpush.msra.mxu0 %v429
        %539 = vmatpush.msra.mxu0 %v421
        %540 = vmatpush.msra.mxu0 %v413
        %541 = vmatpush.msra.mxu0 %v405
        %542 = vmatpush.msra.mxu0 %v397
        %543 = vmatpush.msra.mxu0 %v389
        %544 = vmatpush.msra.mxu0 %v381
        %545 = vmatpush.msra.mxu0 %v373
        %546 = vmatmul.f32.gmra.mxu0 %v507
        %v547 = vpop.f32.mrf.mxu0
        %v548 = vadd.f32 %v528, %v547
        %549 = vdwg.mxu0
        %550 = vmatpush.msra.mxu0 %v366
        %551 = vmatpush.msra.mxu0 %v358
        %552 = vmatpush.msra.mxu0 %v350
        %553 = vmatpush.msra.mxu0 %v342
        %554 = vmatpush.msra.mxu0 %v334
        %555 = vmatpush.msra.mxu0 %v326
        %556 = vmatpush.msra.mxu0 %v318
        %557 = vmatpush.msra.mxu0 %v310
        %558 = vmatpush.msra.mxu0 %v302
        %559 = vmatpush.msra.mxu0 %v294
        %560 = vmatpush.msra.mxu0 %v286
        %561 = vmatpush.msra.mxu0 %v278
        %562 = vmatpush.msra.mxu0 %v270
        %563 = vmatpush.msra.mxu0 %v262
        %564 = vmatpush.msra.mxu0 %v254
        %565 = vmatpush.msra.mxu0 %v246
        %566 = vmatmul.f32.gmra.mxu0 %v506
        %v567 = vpop.f32.mrf.mxu0
        %v568 = vadd.f32 0.0, %v567
        %569 = vdwg.mxu0
        %570 = vmatpush.msra.mxu0 %v494
        %571 = vmatpush.msra.mxu0 %v486
        %572 = vmatpush.msra.mxu0 %v478
        %573 = vmatpush.msra.mxu0 %v470
        %574 = vmatpush.msra.mxu0 %v462
        %575 = vmatpush.msra.mxu0 %v454
        %576 = vmatpush.msra.mxu0 %v446
        %577 = vmatpush.msra.mxu0 %v438
        %578 = vmatpush.msra.mxu0 %v430
        %579 = vmatpush.msra.mxu0 %v422
        %580 = vmatpush.msra.mxu0 %v414
        %581 = vmatpush.msra.mxu0 %v406
        %582 = vmatpush.msra.mxu0 %v398
        %583 = vmatpush.msra.mxu0 %v390
        %584 = vmatpush.msra.mxu0 %v382
        %585 = vmatpush.msra.mxu0 %v374
        %586 = vmatmul.f32.gmra.mxu0 %v507
        %v587 = vpop.f32.mrf.mxu0
        %v588 = vadd.f32 %v568, %v587
        %589 = vdwg.mxu0
        %590 = vmatpush.msra.mxu0 %v367
        %591 = vmatpush.msra.mxu0 %v359
        %592 = vmatpush.msra.mxu0 %v351
        %593 = vmatpush.msra.mxu0 %v343
        %594 = vmatpush.msra.mxu0 %v335
        %595 = vmatpush.msra.mxu0 %v327
        %596 = vmatpush.msra.mxu0 %v319
        %597 = vmatpush.msra.mxu0 %v311
        %598 = vmatpush.msra.mxu0 %v303
        %599 = vmatpush.msra.mxu0 %v295
        %600 = vmatpush.msra.mxu0 %v287
        %601 = vmatpush.msra.mxu0 %v279
        %602 = vmatpush.msra.mxu0 %v271
        %603 = vmatpush.msra.mxu0 %v263
        %604 = vmatpush.msra.mxu0 %v255
        %605 = vmatpush.msra.mxu0 %v247
        %606 = vmatmul.f32.gmra.mxu0 %v506
        %v607 = vpop.f32.mrf.mxu0
        %v608 = vadd.f32 0.0, %v607
        %609 = vdwg.mxu0
        %610 = vmatpush.msra.mxu0 %v495
        %611 = vmatpush.msra.mxu0 %v487
        %612 = vmatpush.msra.mxu0 %v479
        %613 = vmatpush.msra.mxu0 %v471
        %614 = vmatpush.msra.mxu0 %v463
        %615 = vmatpush.msra.mxu0 %v455
        %616 = vmatpush.msra.mxu0 %v447
        %617 = vmatpush.msra.mxu0 %v439
        %618 = vmatpush.msra.mxu0 %v431
        %619 = vmatpush.msra.mxu0 %v423
        %620 = vmatpush.msra.mxu0 %v415
        %621 = vmatpush.msra.mxu0 %v407
        %622 = vmatpush.msra.mxu0 %v399
        %623 = vmatpush.msra.mxu0 %v391
        %624 = vmatpush.msra.mxu0 %v383
        %625 = vmatpush.msra.mxu0 %v375
        %626 = vmatmul.f32.gmra.mxu0 %v507
        %v627 = vpop.f32.mrf.mxu0
        %v628 = vadd.f32 %v608, %v627
        %629 = vdwg.mxu0
        %630 = vmatpush.msra.mxu0 %v368
        %631 = vmatpush.msra.mxu0 %v360
        %632 = vmatpush.msra.mxu0 %v352
        %633 = vmatpush.msra.mxu0 %v344
        %634 = vmatpush.msra.mxu0 %v336
        %635 = vmatpush.msra.mxu0 %v328
        %636 = vmatpush.msra.mxu0 %v320
        %637 = vmatpush.msra.mxu0 %v312
        %638 = vmatpush.msra.mxu0 %v304
        %639 = vmatpush.msra.mxu0 %v296
        %640 = vmatpush.msra.mxu0 %v288
        %641 = vmatpush.msra.mxu0 %v280
        %642 = vmatpush.msra.mxu0 %v272
        %643 = vmatpush.msra.mxu0 %v264
        %644 = vmatpush.msra.mxu0 %v256
        %645 = vmatpush.msra.mxu0 %v248
        %646 = vmatmul.f32.gmra.mxu0 %v506
        %v647 = vpop.f32.mrf.mxu0
        %v648 = vadd.f32 0.0, %v647
        %649 = vdwg.mxu0
        %650 = vmatpush.msra.mxu0 %v496
        %651 = vmatpush.msra.mxu0 %v488
        %652 = vmatpush.msra.mxu0 %v480
        %653 = vmatpush.msra.mxu0 %v472
        %654 = vmatpush.msra.mxu0 %v464
        %655 = vmatpush.msra.mxu0 %v456
        %656 = vmatpush.msra.mxu0 %v448
        %657 = vmatpush.msra.mxu0 %v440
        %658 = vmatpush.msra.mxu0 %v432
        %659 = vmatpush.msra.mxu0 %v424
        %660 = vmatpush.msra.mxu0 %v416
        %661 = vmatpush.msra.mxu0 %v408
        %662 = vmatpush.msra.mxu0 %v400
        %663 = vmatpush.msra.mxu0 %v392
        %664 = vmatpush.msra.mxu0 %v384
        %665 = vmatpush.msra.mxu0 %v376
        %666 = vmatmul.f32.gmra.mxu0 %v507
        %v667 = vpop.f32.mrf.mxu0
        %v668 = vadd.f32 %v648, %v667
        %669 = vdwg.mxu0
        %670 = vmatpush.msra.mxu0 %v369
        %671 = vmatpush.msra.mxu0 %v361
        %672 = vmatpush.msra.mxu0 %v353
        %673 = vmatpush.msra.mxu0 %v345
        %674 = vmatpush.msra.mxu0 %v337
        %675 = vmatpush.msra.mxu0 %v329
        %676 = vmatpush.msra.mxu0 %v321
        %677 = vmatpush.msra.mxu0 %v313
        %678 = vmatpush.msra.mxu0 %v305
        %679 = vmatpush.msra.mxu0 %v297
        %680 = vmatpush.msra.mxu0 %v289
        %681 = vmatpush.msra.mxu0 %v281
        %682 = vmatpush.msra.mxu0 %v273
        %683 = vmatpush.msra.mxu0 %v265
        %684 = vmatpush.msra.mxu0 %v257
        %685 = vmatpush.msra.mxu0 %v249
        %686 = vmatmul.f32.gmra.mxu0 %v506
        %v687 = vpop.f32.mrf.mxu0
        %v688 = vadd.f32 0.0, %v687
        %689 = vdwg.mxu0
        %690 = vmatpush.msra.mxu0 %v497
        %691 = vmatpush.msra.mxu0 %v489
        %692 = vmatpush.msra.mxu0 %v481
        %693 = vmatpush.msra.mxu0 %v473
        %694 = vmatpush.msra.mxu0 %v465
        %695 = vmatpush.msra.mxu0 %v457
        %696 = vmatpush.msra.mxu0 %v449
        %697 = vmatpush.msra.mxu0 %v441
        %698 = vmatpush.msra.mxu0 %v433
        %699 = vmatpush.msra.mxu0 %v425
        %700 = vmatpush.msra.mxu0 %v417
        %701 = vmatpush.msra.mxu0 %v409
        %702 = vmatpush.msra.mxu0 %v401
        %703 = vmatpush.msra.mxu0 %v393
        %704 = vmatpush.msra.mxu0 %v385
        %705 = vmatpush.msra.mxu0 %v377
        %706 = vmatmul.f32.gmra.mxu0 %v507
        %v707 = vpop.f32.mrf.mxu0
        %v708 = vadd.f32 %v688, %v707
        %709 = vdwg.mxu0
        %710 = vmatpush.msra.mxu0 %v370
        %711 = vmatpush.msra.mxu0 %v362
        %712 = vmatpush.msra.mxu0 %v354
        %713 = vmatpush.msra.mxu0 %v346
        %714 = vmatpush.msra.mxu0 %v338
        %715 = vmatpush.msra.mxu0 %v330
        %716 = vmatpush.msra.mxu0 %v322
        %717 = vmatpush.msra.mxu0 %v314
        %718 = vmatpush.msra.mxu0 %v306
        %719 = vmatpush.msra.mxu0 %v298
        %720 = vmatpush.msra.mxu0 %v290
        %721 = vmatpush.msra.mxu0 %v282
        %722 = vmatpush.msra.mxu0 %v274
        %723 = vmatpush.msra.mxu0 %v266
        %724 = vmatpush.msra.mxu0 %v258
        %725 = vmatpush.msra.mxu0 %v250
        %726 = vmatmul.f32.gmra.mxu0 %v506
        %v727 = vpop.f32.mrf.mxu0
        %v728 = vadd.f32 0.0, %v727
        %729 = vdwg.mxu0
        %730 = vmatpush.msra.mxu0 %v498
        %731 = vmatpush.msra.mxu0 %v490
        %732 = vmatpush.msra.mxu0 %v482
        %733 = vmatpush.msra.mxu0 %v474
        %734 = vmatpush.msra.mxu0 %v466
        %735 = vmatpush.msra.mxu0 %v458
        %736 = vmatpush.msra.mxu0 %v450
        %737 = vmatpush.msra.mxu0 %v442
        %738 = vmatpush.msra.mxu0 %v434
        %739 = vmatpush.msra.mxu0 %v426
        %740 = vmatpush.msra.mxu0 %v418
        %741 = vmatpush.msra.mxu0 %v410
        %742 = vmatpush.msra.mxu0 %v402
        %743 = vmatpush.msra.mxu0 %v394
        %744 = vmatpush.msra.mxu0 %v386
        %745 = vmatpush.msra.mxu0 %v378
        %746 = vmatmul.f32.gmra.mxu0 %v507
        %v747 = vpop.f32.mrf.mxu0
        %v748 = vadd.f32 %v728, %v747
        %749 = vdwg.mxu0
        %750 = vmatpush.msra.mxu0 %v371
        %751 = vmatpush.msra.mxu0 %v363
        %752 = vmatpush.msra.mxu0 %v355
        %753 = vmatpush.msra.mxu0 %v347
        %754 = vmatpush.msra.mxu0 %v339
        %755 = vmatpush.msra.mxu0 %v331
        %756 = vmatpush.msra.mxu0 %v323
        %757 = vmatpush.msra.mxu0 %v315
        %758 = vmatpush.msra.mxu0 %v307
        %759 = vmatpush.msra.mxu0 %v299
        %760 = vmatpush.msra.mxu0 %v291
        %761 = vmatpush.msra.mxu0 %v283
        %762 = vmatpush.msra.mxu0 %v275
        %763 = vmatpush.msra.mxu0 %v267
        %764 = vmatpush.msra.mxu0 %v259
        %765 = vmatpush.msra.mxu0 %v251
        %766 = vmatmul.f32.gmra.mxu0 %v506
        %v767 = vpop.f32.mrf.mxu0
        %v768 = vadd.f32 0.0, %v767
        %769 = vdwg.mxu0
        %770 = vmatpush.msra.mxu0 %v499
        %771 = vmatpush.msra.mxu0 %v491
        %772 = vmatpush.msra.mxu0 %v483
        %773 = vmatpush.msra.mxu0 %v475
        %774 = vmatpush.msra.mxu0 %v467
        %775 = vmatpush.msra.mxu0 %v459
        %776 = vmatpush.msra.mxu0 %v451
        %777 = vmatpush.msra.mxu0 %v443
        %778 = vmatpush.msra.mxu0 %v435
        %779 = vmatpush.msra.mxu0 %v427
        %780 = vmatpush.msra.mxu0 %v419
        %781 = vmatpush.msra.mxu0 %v411
        %782 = vmatpush.msra.mxu0 %v403
        %783 = vmatpush.msra.mxu0 %v395
        %784 = vmatpush.msra.mxu0 %v387
        %785 = vmatpush.msra.mxu0 %v379
        %786 = vmatmul.f32.gmra.mxu0 %v507
        %v787 = vpop.f32.mrf.mxu0
        %v788 = vadd.f32 %v768, %v787
        %789 = vdwg.mxu0
        %790 = vmatpush.msra.mxu0 %v372
        %791 = vmatpush.msra.mxu0 %v364
        %792 = vmatpush.msra.mxu0 %v356
        %793 = vmatpush.msra.mxu0 %v348
        %794 = vmatpush.msra.mxu0 %v340
        %795 = vmatpush.msra.mxu0 %v332
        %796 = vmatpush.msra.mxu0 %v324
        %797 = vmatpush.msra.mxu0 %v316
        %798 = vmatpush.msra.mxu0 %v308
        %799 = vmatpush.msra.mxu0 %v300
        %800 = vmatpush.msra.mxu0 %v292
        %801 = vmatpush.msra.mxu0 %v284
        %802 = vmatpush.msra.mxu0 %v276
        %803 = vmatpush.msra.mxu0 %v268
        %804 = vmatpush.msra.mxu0 %v260
        %805 = vmatpush.msra.mxu0 %v252
        %806 = vmatmul.f32.gmra.mxu0 %v506
        %v807 = vpop.f32.mrf.mxu0
        %v808 = vadd.f32 0.0, %v807
        %809 = vdwg.mxu0
        %810 = vmatpush.msra.mxu0 %v500
        %811 = vmatpush.msra.mxu0 %v492
        %812 = vmatpush.msra.mxu0 %v484
        %813 = vmatpush.msra.mxu0 %v476
        %814 = vmatpush.msra.mxu0 %v468
        %815 = vmatpush.msra.mxu0 %v460
        %816 = vmatpush.msra.mxu0 %v452
        %817 = vmatpush.msra.mxu0 %v444
        %818 = vmatpush.msra.mxu0 %v436
        %819 = vmatpush.msra.mxu0 %v428
        %820 = vmatpush.msra.mxu0 %v420
        %821 = vmatpush.msra.mxu0 %v412
        %822 = vmatpush.msra.mxu0 %v404
        %823 = vmatpush.msra.mxu0 %v396
        %824 = vmatpush.msra.mxu0 %v388
        %825 = vmatpush.msra.mxu0 %v380
        %826 = vmatmul.f32.gmra.mxu0 %v507
        %v827 = vpop.f32.mrf.mxu0
        %v828 = vadd.f32 %v808, %v827
        %829 = vdwg.mxu0
        %v838 = vrot.slane %v588, 6
        %v839 = vrot.slane %v628, 4
        %v840 = vrot.slane %v668, 2
        %v841 = vrot.slane %v748, 6
        %v842 = vrot.slane %v788, 4
        %v843 = vrot.slane %v828, 2
        %vm844 = vcmask 1041408
        %v845 = vsel %vm844, %v548, %v838
        %vm846 = vcmask 1045508
        %v847 = vsel %vm846, %v839, %v840
        %v848 = vsel %vm202, %v845, %v847
        %v849 = vsel %vm844, %v708, %v841
        %v850 = vsel %vm846, %v842, %v843
        %v851 = vsel %vm202, %v849, %v850
        %854 = vst [vmem:[%s196] sm:$0xff] %v848
        %855 = vst [vmem:[%s196 + $0x8] sm:$0xff] %v851
        %s856 = sand.u32 %s91, 1
        %s857 = scalar_lea.sflag [#allocation4], %s856
        %s858 = sand.u32 %s91, 1
        %s859 = smul.addr %s858, 16
        %s860 = scalar_lea.vmem [#allocation7], %s859
        // Predicated region
        $region37: #{tpu_custom_call.1} parent=27 // pred_check
          %p861 = pneg %p101
        $region38: #{tpu_custom_call.1} parent=27 // pred_check_branch
          %863 = sbr.rel (%p861) target = $region40
        $region39: #{tpu_custom_call.1} parent=27 // pred_region
          %865 = vsyncadd %s857, 0
          %s866 = smul.addr %s25, 8
          %s867 = smul.addr %s24, 8
          %s868 = sadd.s32 %s866, %s867
          %s869 = smul.addr %s868, 2
          %s870 = scalar_lea.hbm %s2, %s869
          %s872 = sshll.u32 %s860, 4
          %s873 = int_to_ptr.vmem [resolvable:$true] %s872
          %s874 = sshll.u32 %s870, 4
          %s875 = int_to_ptr.hbm [resolvable:$true] %s874
          %877 = dma.vmem_to_hbm [thread:$0]  %s873, 256, %s875, %s857
        $region40: #{tpu_custom_call.1} parent=27 // pred_fallthru
          _
      $region28: #{tpu_custom_call.1} parent=5 // pred_fallthru
        _
      %p878 = scmp.le.s32.totalorder 2, %s15
      // Predicated region
      $region41: #{tpu_custom_call.1} parent=5 // pred_check
        %p879 = pneg %p878
      $region42: #{tpu_custom_call.1} parent=5 // pred_check_branch
        %881 = sbr.rel (%p879) target = $region44
      $region43: #{tpu_custom_call.1} parent=5 // pred_region
        %s882 = ssub.s32 %s15, 2
        // Predicated region
        $region45: #{tpu_custom_call.1} parent=43 // pred_check
          %p883 = pneg %p107
        $region46: #{tpu_custom_call.1} parent=43 // pred_check_branch
          %885 = sbr.rel (%p883) target = $region48
        $region47: #{tpu_custom_call.1} parent=43 // pred_region
          %s886 = sand.u32 %s92, 1
          %s887 = scalar_lea.sflag [#allocation4], %s886
          %s888 = sand.u32 %s92, 1
          %s889 = smul.addr %s888, 16
          %s890 = scalar_lea.vmem [#allocation7], %s889
          %892 = dma.done %s887, 256
        $region48: #{tpu_custom_call.1} parent=43 // pred_fallthru
          _
      $region44: #{tpu_custom_call.1} parent=5 // pred_fallthru
        _
    $region6: #{tpu_custom_call.1} parent=1 // loop_footer
      %s19 = sadd.s32 1, %s15
    $region7: #{tpu_custom_call.1} parent=1 // loop_footer_branch
      %14 = sbr.rel target = $region3
    $region8: #{tpu_custom_call.1} parent=1 // loop_exit
      _
    %893 = vsyncpa [#allocation3], 1
    %s894 = scalar_lea.sflag [#allocation3], 1
    %895 = vsyncpa %s894, 1
    %896 = vsyncpa [#allocation6], 1
    %897 = vsyncpa [#allocation4], 1
    %s898 = scalar_lea.sflag [#allocation4], 1
    %899 = vsyncpa %s898, 1

</llo_original>
